<compile_context>
chip_gen: v7x
topology: tpu7x:2x2x1
jax: 0.10.0
libtpu: 0.0.40
codegen_flags: <defaults>
</compile_context>

<pallas_src>
import jax
import jax.numpy as jnp
from jax.experimental import pallas as pl
from jax.experimental.pallas import tpu as pltpu

BF16 = jnp.bfloat16
F32 = jnp.float32


# ----------------------------------------------------------------------------
# Hardware queries (generation-aware VMEM budget, TensorCore count).
# ----------------------------------------------------------------------------
def _tpu_info():
    try:
        return pltpu.get_tpu_info()
    except Exception:
        return None


def _vmem_budget_bytes():
    cap = None
    info = _tpu_info()
    if info is not None:
        for name in ("vmem_capacity_bytes", "vmem_bytes", "vmem_size_bytes"):
            v = getattr(info, name, None)
            if v:
                cap = int(v)
                break
    if cap is None:
        cap = 128 * 1024 * 1024  # v5e/v6e default; v7x reports 64 MiB itself
    # ~20% headroom for compiler-internal scratch and buffers not accounted for
    return max(16 * 1024 * 1024, int(cap * 0.8))


def _num_tensorcores():
    info = _tpu_info()
    if info is not None:
        for name in ("num_cores", "core_count", "num_tensorcores",
                     "tensorcore_count"):
            v = getattr(info, name, None)
            if v:
                try:
                    return max(1, int(v))
                except (TypeError, ValueError):
                    pass
    return 1


# ----------------------------------------------------------------------------
# Tile-size helpers (budgeted against the per-generation VMEM limit).
# ----------------------------------------------------------------------------
def _time_chunk(T, step_bytes, budget, cap=16):
    """Largest divisor of T that keeps the per-chunk streamed blocks in budget."""
    max_tc = max(1, budget // max(step_bytes, 1))
    cap = max(1, min(cap, max_tc, T))
    for c in range(cap, 0, -1):
        if T % c == 0:
            return c
    return 1


def _row_chunk(M, row_bytes, budget, cap=1024):
    """Row chunk for the layer-0 projection matmul (divides M, 8-aligned)."""
    max_rows = max(8, budget // max(2 * row_bytes, 1))  # x2: double buffering
    cap = min(cap, max_rows)
    if M <= cap:
        return M
    cap = max(8, (cap // 8) * 8)
    for c in range(cap, 7, -8):
        if M % c == 0:
            return c
    for c in range(min(M, cap), 0, -1):
        if M % c == 0:
            return c
    return M


def _group_batch(x_flat, T, B, nB):
    """(T*B, F) time-major -> (nB, T*Bb, F), each batch group time-major."""
    F = x_flat.shape[-1]
    if nB == 1:
        return x_flat.reshape(1, T * B, F)
    Bb = B // nB
    return (x_flat.reshape(T, nB, Bb, F)
            .transpose(1, 0, 2, 3)
            .reshape(nB, T * Bb, F))


# ----------------------------------------------------------------------------
# Pallas kernel: hoisted layer-0 input projection (bulk of layer-0 FLOPs).
# bf16 operands, f32 accumulation; outputs split into fwd/bwd gate streams.
# ----------------------------------------------------------------------------
def _proj_first_kernel(x_ref, w_ref, b_ref, gf_ref, gb_ref):
    H4 = gf_ref.shape[-1]
    g = jnp.dot(x_ref[...], w_ref[...],
                preferred_element_type=jnp.float32) + b_ref[...]
    gf_ref[...] = g[:, :H4].astype(gf_ref.dtype)
    gb_ref[...] = g[:, H4:].astype(gb_ref.dtype)


def input_proj_first(x2d, w_in, bias):
    """x2d: (T*B, E) bf16 time-major; w_in: (E, 8H) bf16; bias: (1, 8H) f32.
    Returns (G_f, G_b), each (T*B, 4H) bf16."""
    M, E = x2d.shape
    H8 = w_in.shape[1]
    H4 = H8 // 2
    budget = _vmem_budget_bytes()
    weight_bytes = E * H8 * 2 + H8 * 4
    row_bytes = (E + 2 * H4) * 2  # bf16 input row + two bf16 output rows
    Mc = _row_chunk(M, row_bytes, max(budget - weight_bytes, 8 * row_bytes))
    return pl.pallas_call(
        _proj_first_kernel,
        out_shape=(jax.ShapeDtypeStruct((M, H4), BF16),
                   jax.ShapeDtypeStruct((M, H4), BF16)),
        grid_spec=pltpu.PrefetchScalarGridSpec(
            num_scalar_prefetch=0,
            grid=(M // Mc,),
            in_specs=[
                pl.BlockSpec((Mc, E), lambda i: (i, 0)),
                # constant-index weight/bias: single-buffered (no wasted VMEM)
                pl.BlockSpec((E, H8), lambda i: (0, 0),
                             pipeline_mode=pl.Buffered(1)),
                pl.BlockSpec((1, H8), lambda i: (0, 0),
                             pipeline_mode=pl.Buffered(1)),
            ],
            out_specs=[
                pl.BlockSpec((Mc, H4), lambda i: (i, 0)),
                pl.BlockSpec((Mc, H4), lambda i: (i, 0)),
            ],
        ),
        compiler_params=pltpu.CompilerParams(
            dimension_semantics=("parallel",),
            vmem_limit_bytes=budget),
    )(x2d, w_in, bias)


# ----------------------------------------------------------------------------
# Pallas kernel: fused bidirectional recurrence (optionally with the next
# layer's input projection fused in), time-chunked, batch-grouped.
# Grid = (nB, nC): batch groups "parallel" (v7x megacore), time "arbitrary".
# ----------------------------------------------------------------------------
def _make_rec_kernel(*, Tc, H, Bb, fused, last):
    H4 = 4 * H

    def kernel(*refs):
        if fused:
            (xff, xbf, xfb, xbb,
             w_ff, w_bf, w_fb, w_bb, bias_ref,
             whhf_ref, whhb_ref,
             o0, o1,
             hf_sc, hb_sc, c_sc, gfs_sc, gbs_sc) = refs
        else:
            (gf_ref, gb_ref, whhf_ref, whhb_ref,
             o0, o1,
             hf_sc, hb_sc, c_sc) = refs

        c_idx = pl.program_id(1)

        @pl.when(c_idx == 0)
        def _():
            hf_sc[...] = jnp.zeros_like(hf_sc)
            hb_sc[...] = jnp.zeros_like(hb_sc)
            c_sc[...] = jnp.zeros_like(c_sc)

        # Dense per-direction recurrent weights (no zero-padded block-diagonal),
        # single-buffered residents.
        whhf = whhf_ref[...]  # (H, 4H) bf16
        whhb = whhb_ref[...]  # (H, 4H) bf16

        if fused:
            # Per-chunk input projection: big-M MXU matmuls with Wih resident
            # in VMEM; the (T,B,8H) gate stream never touches HBM.
            b_vec = bias_ref[...]  # (1, 8H) f32
            gfs_sc[...] = (
                jnp.dot(xff[...], w_ff[...], preferred_element_type=jnp.float32)
                + jnp.dot(xbf[...], w_bf[...], preferred_element_type=jnp.float32)
                + b_vec[:, :H4])
            gbs_sc[...] = (
                jnp.dot(xfb[...], w_fb[...], preferred_element_type=jnp.float32)
                + jnp.dot(xbb[...], w_bb[...], preferred_element_type=jnp.float32)
                + b_vec[:, H4:])

        def _rows(j):
            r = j * Bb
            if isinstance(r, int):
                return r
            return pl.multiple_of(r, 8) if Bb % 8 == 0 else r

        def read_gf(j):
            if fused:
                return gfs_sc[pl.ds(_rows(j), Bb), :]
            return gf_ref[pl.ds(_rows(j), Bb), :].astype(jnp.float32)

        def read_gb(j):
            jr = Tc - 1 - j
            if fused:
                return gbs_sc[pl.ds(_rows(jr), Bb), :]
            return gb_ref[pl.ds(_rows(jr), Bb), :].astype(jnp.float32)

        def step(j, carry):
            h_f, h_b, c_stk = carry  # f32 carries
            # two dense per-direction recurrent matmuls (bf16 in, f32 accum)
            gm_f = jnp.dot(h_f.astype(jnp.bfloat16), whhf,
                           preferred_element_type=jnp.float32)
            gm_b = jnp.dot(h_b.astype(jnp.bfloat16), whhb,
                           preferred_element_type=jnp.float32)
            # single stacked (2*Bb, 4H) pass through the nonlinearities for
            # both directions (sublane-axis stack, cell state kept stacked)
            gates = jnp.concatenate([gm_f + read_gf(j), gm_b + read_gb(j)],
                                    axis=0)
            i_g = jax.nn.sigmoid(gates[:, 0 * H:1 * H])
            f_g = jax.nn.sigmoid(gates[:, 1 * H:2 * H])
            g_g = jnp.tanh(gates[:, 2 * H:3 * H])
            o_g = jax.nn.sigmoid(gates[:, 3 * H:4 * H])
            c_new = f_g * c_stk + i_g * g_g
            h_new = o_g * jnp.tanh(c_new)
            h_f = h_new[:Bb]
            h_b = h_new[Bb:]
            if not last:
                o0[pl.ds(_rows(j), Bb), :] = h_f.astype(o0.dtype)
                o1[pl.ds(_rows(Tc - 1 - j), Bb), :] = h_b.astype(o1.dtype)
            return (h_f, h_b, c_new)

        # Full unroll only for small tiles; bounded unroll otherwise to avoid
        # vreg spill in the unrolled body at large B*H.
        unroll = True if Bb * H <= 4096 else 2
        h_f, h_b, c_stk = jax.lax.fori_loop(
            0, Tc, step, (hf_sc[...], hb_sc[...], c_sc[...]), unroll=unroll)
        hf_sc[...] = h_f
        hb_sc[...] = h_b
        c_sc[...] = c_stk

        if last:
            # Only hn[-2]/hn[-1] are consumed downstream: skip the full (T,B,H)
            # stream writeback entirely (pure HBM-roofline saving).
            o0[...] = h_f
            o1[...] = h_b

    return kernel


def bilstm_layer(inputs, layer_params, *, T, fused, last):
    """One bidirectional LSTM layer as a single Pallas recurrence kernel.

    inputs: two arrays shaped (nB, T*Bb, F) (batch-grouped, time-major, bf16):
        fused=False -> precomputed fwd/bwd gate streams, F = 4H
        fused=True  -> previous layer's fwd/bwd hidden streams, F = H
    Returns:
        last=False -> (out_f, out_b) hidden streams, (nB, T*Bb, H) bf16
        last=True  -> (h_f_last, h_b_last), (nB, Bb, H) f32
    """
    whh_f = layer_params["whh_f"]
    whh_b = layer_params["whh_b"]
    H = whh_f.shape[0]
    H4 = 4 * H
    nB, TBb, _ = inputs[0].shape
    Bb = TBb // T

    budget = _vmem_budget_bytes()
    if fused:
        step_bytes = Bb * (4 * H * 2 * 2                    # 4 bf16 input streams, 2x buf
                           + (0 if last else 2 * H * 2 * 2)  # 2 bf16 output streams
                           + 2 * H4 * 4)                     # f32 chunk-gate scratch
        weight_bytes = 6 * H * H4 * 2 + 2 * H4 * 4
    else:
        step_bytes = Bb * (2 * H4 * 2 * 2 + (0 if last else 2 * H * 2 * 2))
        weight_bytes = 2 * H * H4 * 2
    Tc = _time_chunk(T, step_bytes, max(budget - weight_bytes, step_bytes))
    nC = T // Tc

    def fwd_map(b, c):
        return (b, c, 0)

    def bwd_map(b, c):
        return (b, nC - 1 - c, 0)

    def wspec(shape):
        # constant block index -> single-buffered resident (saves VMEM)
        return pl.BlockSpec(shape, lambda b, c: (0, 0),
                            pipeline_mode=pl.Buffered(1))

    if fused:
        in_specs = [
            pl.BlockSpec((None, Tc * Bb, H), fwd_map),   # prev fwd, fwd time
            pl.BlockSpec((None, Tc * Bb, H), fwd_map),   # prev bwd, fwd time
            pl.BlockSpec((None, Tc * Bb, H), bwd_map),   # prev fwd, rev time
            pl.BlockSpec((None, Tc * Bb, H), bwd_map),   # prev bwd, rev time
            wspec((H, H4)), wspec((H, H4)), wspec((H, H4)), wspec((H, H4)),
            wspec((1, 2 * H4)),
            wspec((H, H4)), wspec((H, H4)),
        ]
        args = (inputs[0], inputs[1], inputs[0], inputs[1],
                layer_params["w_ff"], layer_params["w_bf"],
                layer_params["w_fb"], layer_params["w_bb"],
                layer_params["bias"], whh_f, whh_b)
    else:
        in_specs = [
            pl.BlockSpec((None, Tc * Bb, H4), fwd_map),  # fwd gate stream
            pl.BlockSpec((None, Tc * Bb, H4), bwd_map),  # bwd gate stream (rev)
            wspec((H, H4)), wspec((H, H4)),
        ]
        args = (inputs[0], inputs[1], whh_f, whh_b)

    if last:
        out_shape = (jax.ShapeDtypeStruct((nB, Bb, H), F32),
                     jax.ShapeDtypeStruct((nB, Bb, H), F32))
        out_specs = [pl.BlockSpec((None, Bb, H), lambda b, c: (b, 0, 0)),
                     pl.BlockSpec((None, Bb, H), lambda b, c: (b, 0, 0))]
    else:
        out_shape = (jax.ShapeDtypeStruct((nB, T * Bb, H), BF16),
                     jax.ShapeDtypeStruct((nB, T * Bb, H), BF16))
        out_specs = [pl.BlockSpec((None, Tc * Bb, H), fwd_map),
                     pl.BlockSpec((None, Tc * Bb, H), bwd_map)]

    scratch = [pltpu.VMEM((Bb, H), F32),       # h fwd carry
               pltpu.VMEM((Bb, H), F32),       # h bwd carry
               pltpu.VMEM((2 * Bb, H), F32)]   # c carry, stacked [fwd; bwd]
    if fused:
        scratch += [pltpu.VMEM((Tc * Bb, H4), F32),   # fwd chunk gates
                    pltpu.VMEM((Tc * Bb, H4), F32)]   # bwd chunk gates

    kernel = _make_rec_kernel(Tc=Tc, H=H, Bb=Bb, fused=fused, last=last)

    return pl.pallas_call(
        kernel,
        out_shape=out_shape,
        grid_spec=pltpu.PrefetchScalarGridSpec(
            num_scalar_prefetch=0,
            grid=(nB, nC),
            in_specs=in_specs,
            out_specs=out_specs,
            scratch_shapes=scratch),
        compiler_params=pltpu.CompilerParams(
            dimension_semantics=("parallel", "arbitrary"),
            vmem_limit_bytes=budget),
    )(*args)


# ----------------------------------------------------------------------------
# Full module forward (glue in plain JAX: free reshapes + the tiny FC).
# ----------------------------------------------------------------------------
def lstm_module_forward(text_bte, params):
    """text_bte: (B, T, E) batch-first (PyTorch convention). Returns (B,1) logits."""
    B0, T, E = text_bte.shape
    n_layers = len(params["layers"])
    H = params["layers"][0]["whh_f"].shape[0]

    # Pad batch to a sublane-aligned size (review: B multiple of 8); padded
    # rows are discarded from the logits at the end.
    B = max(8, ((B0 + 7) // 8) * 8)
    if B != B0:
        text_bte = jnp.pad(text_bte, ((0, B - B0), (0, 0), (0, 0)))

    # Batch groups for the "parallel" grid axis (feeds v7x's 2 TensorCores);
    # stays 1 on single-core chips (v5e/v6e).
    ncores = _num_tensorcores()
    nB = ncores if (ncores > 1 and B % (8 * ncores) == 0) else 1

    x2d = jnp.transpose(text_bte, (1, 0, 2)).reshape(T * B, E).astype(BF16)

    layer0 = params["layers"][0]
    gf2d, gb2d = input_proj_first(x2d, layer0["w_in"], layer0["bias"])
    gf = _group_batch(gf2d, T, B, nB)
    gb = _group_batch(gb2d, T, B, nB)

    outs = bilstm_layer((gf, gb), layer0, T=T, fused=False,
                        last=(n_layers == 1))
    for l in range(1, n_layers):
        outs = bilstm_layer(outs, params["layers"][l], T=T, fused=True,
                            last=(l == n_layers - 1))

    h_f_last = outs[0].reshape(B, H).astype(F32)   # hn[-2]
    h_b_last = outs[1].reshape(B, H).astype(F32)   # hn[-1]

    concatenated = jnp.concatenate([h_f_last, h_b_last], axis=1)  # (B, 2H)
    dropped = concatenated  # TODO(synk): dropout is eval-mode identity (no RNG mask)
    logits = dropped @ params["fc_w_t"] + params["fc_b"]
    return logits[:B0]


# ----------------------------------------------------------------------------
# Deterministic parameter construction (PyTorch nn.LSTM / nn.Linear shapes),
# pre-packed into the kernel-friendly layouts (bf16 MXU operands).
# ----------------------------------------------------------------------------
def init_params(key, embedding_dim, hidden_dim, n_layers):
    H = hidden_dim
    k = 1.0 / jnp.sqrt(jnp.asarray(H, F32))
    layers = []
    for l in range(n_layers):
        e_in = embedding_dim if l == 0 else 2 * H
        raw = {}
        for d in ("fwd", "bwd"):
            key, k1, k2, k3, k4 = jax.random.split(key, 5)
            wih = jax.random.uniform(k1, (4 * H, e_in), F32, -k, k)
            whh = jax.random.uniform(k2, (4 * H, H), F32, -k, k)
            b_ih = jax.random.uniform(k3, (4 * H,), F32, -k, k)
            b_hh = jax.random.uniform(k4, (4 * H,), F32, -k, k)
            raw[d] = (wih, whh, b_ih, b_hh)

        wih_f, whh_f, bih_f, bhh_f = raw["fwd"]
        wih_b, whh_b, bih_b, bhh_b = raw["bwd"]

        layer = {
            "_raw": raw,
            # biases folded once (b_ih + b_hh), f32, [fwd 4H | bwd 4H]
            "bias": jnp.concatenate([bih_f + bhh_f,
                                     bih_b + bhh_b]).reshape(1, 8 * H),
            # dense per-direction recurrent weights (H, 4H), bf16
            "whh_f": whh_f.T.astype(BF16),
            "whh_b": whh_b.T.astype(BF16),
        }
        if l == 0:
            # (E, 8H): columns = [fwd i,f,g,o | bwd i,f,g,o]
            layer["w_in"] = jnp.concatenate([wih_f.T, wih_b.T],
                                            axis=1).astype(BF16)
        else:
            # input of layer l>=1 is concat([prev_fwd, prev_bwd]); split Wih
            # row-wise so the fused kernel never materialises the concat
            layer["w_ff"] = wih_f[:, :H].T.astype(BF16)  # prev fwd -> fwd gates
            layer["w_bf"] = wih_f[:, H:].T.astype(BF16)  # prev bwd -> fwd gates
            layer["w_fb"] = wih_b[:, :H].T.astype(BF16)  # prev fwd -> bwd gates
            layer["w_bb"] = wih_b[:, H:].T.astype(BF16)  # prev bwd -> bwd gates
        layers.append(layer)

    key, k5, k6 = jax.random.split(key, 3)
    kf = 1.0 / jnp.sqrt(jnp.asarray(2 * H, F32))
    fc_w = jax.random.uniform(k5, (1, 2 * H), F32, -kf, kf)
    fc_b = jax.random.uniform(k6, (1,), F32, -kf, kf)
    return {"layers": layers, "fc_w_t": fc_w.T, "fc_b": fc_b.reshape(1, 1)}


# ----------------------------------------------------------------------------
# Pure-JAX f32 reference (lax.scan) for the correctness check.
# ----------------------------------------------------------------------------
def _ref_layer(x_tbe, wih, whh, b_ih, b_hh):
    H = whh.shape[1]
    B = x_tbe.shape[1]

    def step(carry, xt):
        h, c = carry
        gates = xt @ wih.T + h @ whh.T + b_ih + b_hh
        i = jax.nn.sigmoid(gates[:, :H])
        f = jax.nn.sigmoid(gates[:, H:2 * H])
        g = jnp.tanh(gates[:, 2 * H:3 * H])
        o = jax.nn.sigmoid(gates[:, 3 * H:])
        c = f * c + i * g
        h = o * jnp.tanh(c)
        return (h, c), h

    init = (jnp.zeros((B, H), F32), jnp.zeros((B, H), F32))
    (h, _), out = jax.lax.scan(step, init, x_tbe)
    return out, h


def ref_forward(text_bte, params):
    x = jnp.transpose(text_bte, (1, 0, 2))
    h_f = h_b = None
    for layer in params["layers"]:
        out_f, h_f = _ref_layer(x, *layer["_raw"]["fwd"])
        out_b_rev, h_b = _ref_layer(x[::-1], *layer["_raw"]["bwd"])
        x = jnp.concatenate([out_f, out_b_rev[::-1]], axis=-1)
    cat = jnp.concatenate([h_f, h_b], axis=1)
    return cat @ params["fc_w_t"] + params["fc_b"]


if __name__ == "__main__":
    # small, sublane-aligned demo shapes
    B, T, E, H, n_layers = 8, 8, 32, 32, 2

    key = jax.random.PRNGKey(0)
    key, pkey, xkey = jax.random.split(key, 3)
    params = init_params(pkey, E, H, n_layers)
    text = jax.random.normal(xkey, (B, T, E), F32)  # (B, T, E) batch-first

    logits = jax.block_until_ready(lstm_module_forward(text, params))

    ref = ref_forward(text, params)
    assert logits.shape == (B, 1), logits.shape
    # bf16 MXU operands / bf16 inter-layer streams vs the all-f32 reference
    assert jnp.allclose(logits, ref, rtol=5e-2, atol=5e-2), (logits, ref)

    print("KERNEL_OK")
</pallas_src>

<mosaic_0001>
module attributes {stable_mosaic.version = 11 : i64} {
  func.func @_proj_first_kernel(%arg0: i32, %arg1: memref<64x32xbf16, #tpu.memory_space<vmem>>, %arg2: memref<32x256xbf16, #tpu.memory_space<vmem>>, %arg3: memref<1x256xf32, #tpu.memory_space<vmem>>, %arg4: memref<64x128xbf16, #tpu.memory_space<vmem>>, %arg5: memref<64x128xbf16, #tpu.memory_space<vmem>>) attributes {dimension_semantics = [#tpu.dimension_semantics<parallel>], iteration_bounds = array<i64: 1>, scalar_prefetch = 0 : i64, scratch_operands = 0 : i64, tpu.core_type = #tpu.core_type<tc>, window_params = [{transform_indices = @transform_0, window_bounds = array<i64: 64, 32>}, {pipeline_mode = #tpu.pipeline_mode<synchronous>, transform_indices = @transform_1, window_bounds = array<i64: 32, 256>}, {pipeline_mode = #tpu.pipeline_mode<synchronous>, transform_indices = @transform_2, window_bounds = array<i64: 1, 256>}, {transform_indices = @transform_3, window_bounds = array<i64: 64, 128>}, {transform_indices = @transform_4, window_bounds = array<i64: 64, 128>}]} {
    %c0 = arith.constant 0 : index
    %c0_0 = arith.constant 0 : index
    %0 = vector.load %arg1[%c0, %c0_0] : memref<64x32xbf16, #tpu.memory_space<vmem>>, vector<64x32xbf16>
    %c0_1 = arith.constant 0 : index
    %c0_2 = arith.constant 0 : index
    %1 = vector.load %arg2[%c0_1, %c0_2] : memref<32x256xbf16, #tpu.memory_space<vmem>>, vector<32x256xbf16>
    %cst = arith.constant dense<0.000000e+00> : vector<64x256xf32>
    %2 = tpu.matmul %0, %1, %cst {dimension_numbers = #tpu.dot_dimension_numbers<[1], [0], [0], [1], [0, 0, 1, 1], [], []>} : vector<64x32xbf16>, vector<32x256xbf16>, vector<64x256xf32> -> vector<64x256xf32>
    %c0_3 = arith.constant 0 : index
    %c0_4 = arith.constant 0 : index
    %3 = vector.load %arg3[%c0_3, %c0_4] : memref<1x256xf32, #tpu.memory_space<vmem>>, vector<1x256xf32>
    %4 = vector.broadcast %3 : vector<1x256xf32> to vector<64x256xf32>
    %5 = arith.addf %2, %4 : vector<64x256xf32>
    %6 = vector.extract_strided_slice %5 {offsets = [0, 0], sizes = [64, 128], strides = [1, 1]} : vector<64x256xf32> to vector<64x128xf32>
    %7 = arith.truncf %6 : vector<64x128xf32> to vector<64x128xbf16>
    %c0_5 = arith.constant 0 : index
    %c0_6 = arith.constant 0 : index
    %8 = vector.load %arg4[%c0_5, %c0_6] : memref<64x128xbf16, #tpu.memory_space<vmem>>, vector<64x128xbf16>
    tpu.vector_store %arg4[%c0_5, %c0_6], %7 {strides = array<i32>} : memref<64x128xbf16, #tpu.memory_space<vmem>>, vector<64x128xbf16>,
    %9 = vector.extract_strided_slice %5 {offsets = [0, 128], sizes = [64, 128], strides = [1, 1]} : vector<64x256xf32> to vector<64x128xf32>
    %10 = arith.truncf %9 : vector<64x128xf32> to vector<64x128xbf16>
    %c0_7 = arith.constant 0 : index
    %c0_8 = arith.constant 0 : index
    %11 = vector.load %arg5[%c0_7, %c0_8] : memref<64x128xbf16, #tpu.memory_space<vmem>>, vector<64x128xbf16>
    tpu.vector_store %arg5[%c0_7, %c0_8], %10 {strides = array<i32>} : memref<64x128xbf16, #tpu.memory_space<vmem>>, vector<64x128xbf16>,
    return
  }
  func.func @transform_0(%arg0: i32) -> (i32, i32) {
    %c0_i32 = arith.constant 0 : i32
    %c0_i32_0 = arith.constant 0 : i32
    return %arg0, %c0_i32 : i32, i32
  }
  func.func @transform_1(%arg0: i32) -> (i32, i32) {
    %c0_i32 = arith.constant 0 : i32
    %c0_i32_0 = arith.constant 0 : i32
    %c0_i32_1 = arith.constant 0 : i32
    return %c0_i32, %c0_i32_0 : i32, i32
  }
  func.func @transform_2(%arg0: i32) -> (i32, i32) {
    %c0_i32 = arith.constant 0 : i32
    %c0_i32_0 = arith.constant 0 : i32
    %c0_i32_1 = arith.constant 0 : i32
    return %c0_i32, %c0_i32_0 : i32, i32
  }
  func.func @transform_3(%arg0: i32) -> (i32, i32) {
    %c0_i32 = arith.constant 0 : i32
    %c0_i32_0 = arith.constant 0 : i32
    return %arg0, %c0_i32 : i32, i32
  }
  func.func @transform_4(%arg0: i32) -> (i32, i32) {
    %c0_i32 = arith.constant 0 : i32
    %c0_i32_0 = arith.constant 0 : i32
    return %arg0, %c0_i32 : i32, i32
  }
}

</mosaic_0001>

<llo_original>
// kernel: tpu_custom_call.1
$region0: #{tpu_custom_call.1}
  #allocation0 [shape = 'u32[]', space=smem, size = 0x4, offset = 0x4, fixed_abs, tag = 'smem constant byte address 0x4 - core index']
  #allocation1 [shape = 'u32[144,128]{1,0:T(1,128)}', space=vmem, size = 0x12000, scoped, tag = 'internal scratch']
  %s0 = inlined_call_operand.hbm [shape: bf16[64,32], index: 0, kind: input, shape index: {}]
  %s1 = inlined_call_operand.hbm [shape: bf16[32,256], index: 1, kind: input, shape index: {}]
  %s2 = inlined_call_operand.hbm [shape: f32[1,256], index: 2, kind: input, shape index: {}]
  %s3 = inlined_call_operand.hbm [shape: bf16[64,128], index: 3, kind: output, shape index: {0}]
  %s4 = inlined_call_operand.hbm [shape: bf16[64,128], index: 4, kind: output, shape index: {1}]
  %5 = xla_tuple %s3, %s4
  %s6 = sld [smem:[#allocation0]]
  $region42: #{tpu_custom_call.1} parent=0
    _
  %s8 = ssub.s32 1, %s6
  %s9 = scalar_select 0, %s8, %s6
  $region1: #{tpu_custom_call.1} parent=0
    #allocation2 [shape = 'u8[16384]{0}', space=vmem, size = 0x4000, scoped, tag = 'input window, operand 0, single buffered']
    #allocation3 [shape = 's32[1]{0}', space=sflag, size = 0x4, scoped, tag = 'scoped memory for tpu_custom_call.1']
    #allocation4 [shape = 's32[1]{0}', space=sflag, size = 0x4, scoped, tag = 'scoped memory for tpu_custom_call.1']
    #allocation5 [shape = 'u8[16384]{0}', space=vmem, size = 0x4000, scoped, tag = 'input window, operand 1, single buffered']
    #allocation6 [shape = 's32[1]{0}', space=sflag, size = 0x4, scoped, tag = 'scoped memory for tpu_custom_call.1']
    #allocation7 [shape = 'u8[1024]{0}', space=vmem, size = 0x400, scoped, tag = 'input window, operand 2, single buffered']
    #allocation8 [shape = 'u8[16384]{0}', space=vmem, size = 0x4000, scoped, tag = 'output window, operand 0, single buffered']
    #allocation9 [shape = 'u8[16384]{0}', space=vmem, size = 0x4000, scoped, tag = 'output window, operand 1, single buffered']
    #allocation10 [shape = 's32[1]{0}', space=sflag, size = 0x4, scoped, tag = 'scoped memory for tpu_custom_call.1']
    %10 = vsyncpa [#allocation3], 0
    %11 = vsyncpa [#allocation6], 0
    %12 = vsyncpa [#allocation4], 0
    %13 = vsyncpa [#allocation10], 0
    // Predicated region
    $region2: #{tpu_custom_call.1} parent=1 // pred_check
      _
    $region3: #{tpu_custom_call.1} parent=1 // pred_check_branch
      %15 = sbr.rel (0) target = $region5
    $region4: #{tpu_custom_call.1} parent=1 // pred_region
      %s17 = ssub.s32 512, 512
      %18 = vsyncadd [#allocation3], %s17
      %s19 = sshll.u32 [#allocation2], 4
      %s20 = int_to_ptr.vmem [resolvable:$true] %s19
      %25 = dma.hbm_to_vmem [thread:$0]  %s0, 512, %s20, [#allocation3], 64, 64, 4
    $region5: #{tpu_custom_call.1} parent=1 // pred_fallthru
      _
    // Predicated region
    $region6: #{tpu_custom_call.1} parent=1 // pred_check
      _
    $region7: #{tpu_custom_call.1} parent=1 // pred_check_branch
      %27 = sbr.rel (0) target = $region9
    $region8: #{tpu_custom_call.1} parent=1 // pred_region
      %s29 = ssub.s32 512, 512
      %30 = vsyncadd [#allocation6], %s29
      %s31 = sshll.u32 [#allocation5], 4
      %s32 = int_to_ptr.vmem [resolvable:$true] %s31
      %37 = dma.hbm_to_vmem [thread:$0]  %s1, 512, %s32, [#allocation6], 128, 128, 8
    $region9: #{tpu_custom_call.1} parent=1 // pred_fallthru
      _
    // Predicated region
    $region10: #{tpu_custom_call.1} parent=1 // pred_check
      _
    $region11: #{tpu_custom_call.1} parent=1 // pred_check_branch
      %39 = sbr.rel (0) target = $region13
    $region12: #{tpu_custom_call.1} parent=1 // pred_region
      %s41 = ssub.s32 32, 32
      %42 = vsyncadd [#allocation6], %s41
      %s44 = sshll.u32 [#allocation7], 4
      %s45 = int_to_ptr.vmem [resolvable:$true] %s44
      %47 = dma.hbm_to_vmem [thread:$0]  %s2, 32, %s45, [#allocation6]
    $region13: #{tpu_custom_call.1} parent=1 // pred_fallthru
      _
    // Predicated region
    $region14: #{tpu_custom_call.1} parent=1 // pred_check
      _
    $region15: #{tpu_custom_call.1} parent=1 // pred_check_branch
      %49 = sbr.rel (0) target = $region17
    $region16: #{tpu_custom_call.1} parent=1 // pred_region
      %50 = dma.done [#allocation3], 512
    $region17: #{tpu_custom_call.1} parent=1 // pred_fallthru
      _
    // Predicated region
    $region18: #{tpu_custom_call.1} parent=1 // pred_check
      _
    $region19: #{tpu_custom_call.1} parent=1 // pred_check_branch
      %52 = sbr.rel (0) target = $region21
    $region20: #{tpu_custom_call.1} parent=1 // pred_region
      %53 = dma.done [#allocation6], 512
    $region21: #{tpu_custom_call.1} parent=1 // pred_fallthru
      _
    // Predicated region
    $region22: #{tpu_custom_call.1} parent=1 // pred_check
      _
    $region23: #{tpu_custom_call.1} parent=1 // pred_check_branch
      %55 = sbr.rel (0) target = $region25
    $region24: #{tpu_custom_call.1} parent=1 // pred_region
      %56 = dma.done [#allocation6], 32
    $region25: #{tpu_custom_call.1} parent=1 // pred_fallthru
      _
    %v58 = vld [vmem:[#allocation2] sm:$0xf]
    %v59 = vld [vmem:[#allocation2 + $0x4] sm:$0xf]
    %v60 = vld [vmem:[#allocation2 + $0x8] sm:$0xf]
    %v61 = vld [vmem:[#allocation2 + $0xc] sm:$0xf]
    %v62 = vld [vmem:[#allocation2 + $0x10] sm:$0xf]
    %v63 = vld [vmem:[#allocation2 + $0x14] sm:$0xf]
    %v64 = vld [vmem:[#allocation2 + $0x18] sm:$0xf]
    %v65 = vld [vmem:[#allocation2 + $0x1c] sm:$0xf]
    %v66 = vld [vmem:[#allocation5] sm:$0xff]
    %v67 = vld [vmem:[#allocation5 + $0x8] sm:$0xff]
    %v68 = vld [vmem:[#allocation5 + $0x10] sm:$0xff]
    %v69 = vld [vmem:[#allocation5 + $0x18] sm:$0xff]
    %v70 = vld [vmem:[#allocation7] sm:$0x3]
    %v72 = vlaneseq
    %v73 = vshrl.u32 %v72, 7
    %v74 = vsub.s32 0, %v73
    %v75 = vrot.slane %v70, %v74
    %v76 = vlaneseq
    %v77 = vshrl.u32 %v76, 7
    %v78 = vsub.s32 1, %v77
    %v79 = vrot.slane %v70, %v78
    %v90 = vunpack.c.l.b16 %v58
    %v91 = vunpack.c.l.b16 %v59
    %v92 = vunpack.c.l.b16 %v60
    %v93 = vunpack.c.l.b16 %v61
    %v94 = vunpack.c.l.b16 %v62
    %v95 = vunpack.c.l.b16 %v63
    %v96 = vunpack.c.l.b16 %v64
    %v97 = vunpack.c.l.b16 %v65
    %v98 = vpack.c.b16 %v91, %v90
    %v99 = vpack.c.b16 %v93, %v92
    %v100 = vpack.c.b16 %v95, %v94
    %v101 = vpack.c.b16 %v97, %v96
    %v106 = vunpack.c.l.b16 %v66
    %v107 = vunpack.c.h.b16 %v66
    %v108 = vunpack.c.l.b16 %v67
    %v109 = vunpack.c.h.b16 %v67
    %v110 = vunpack.c.l.b16 %v68
    %v111 = vunpack.c.h.b16 %v68
    %v112 = vunpack.c.l.b16 %v69
    %v113 = vunpack.c.h.b16 %v69
    %v114 = vpack.c.b16 %v108, %v106
    %v115 = vpack.c.b16 %v109, %v107
    %v116 = vpack.c.b16 %v112, %v110
    %v117 = vpack.c.b16 %v113, %v111
    %vm122 = vcmask 261120
    %v124 = vsel %vm122, %v98, 0
    %v127 = vsel %vm122, %v99, 0
    %v130 = vsel %vm122, %v100, 0
    %v133 = vsel %vm122, %v101, 0
    %135 = vmatprep.subr.bf16.mxu0 %v115
    %136 = vmatpush1.bf16.msra.mxu0 %v114
    %137 = vmatprep.subr.bf16.mxu0 %v117
    %138 = vmatpush1.bf16.msra.mxu0 %v116
    %139 = vmatprep.subr.bf16.mxu0 0
    %140 = vmatpush1.bf16.msra.mxu0 0
    %141 = vmatprep.subr.bf16.mxu0 0
    %142 = vmatpush1.bf16.msra.mxu0 0
    %143 = vmatprep.subr.bf16.mxu0 0
    %144 = vmatpush1.bf16.msra.mxu0 0
    %145 = vmatprep.subr.bf16.mxu0 0
    %146 = vmatpush1.bf16.msra.mxu0 0
    %147 = vmatprep.subr.bf16.mxu0 0
    %148 = vmatpush1.bf16.msra.mxu0 0
    %149 = vmatprep.subr.bf16.mxu0 0
    %150 = vmatpush1.bf16.msra.mxu0 0
    %151 = vmatprep.subr.bf16.mxu0 0
    %152 = vmatpush1.bf16.msra.mxu0 0
    %153 = vmatprep.subr.bf16.mxu0 0
    %154 = vmatpush1.bf16.msra.mxu0 0
    %155 = vmatprep.subr.bf16.mxu0 0
    %156 = vmatpush1.bf16.msra.mxu0 0
    %157 = vmatprep.subr.bf16.mxu0 0
    %158 = vmatpush1.bf16.msra.mxu0 0
    %159 = vmatprep.subr.bf16.mxu0 0
    %160 = vmatpush1.bf16.msra.mxu0 0
    %161 = vmatprep.subr.bf16.mxu0 0
    %162 = vmatpush1.bf16.msra.mxu0 0
    %163 = vmatprep.subr.bf16.mxu0 0
    %164 = vmatpush1.bf16.msra.mxu0 0
    %165 = vmatprep.subr.bf16.mxu0 0
    %166 = vmatpush1.bf16.msra.mxu0 0
    %167 = vmatprep.mubr.bf16.mxu0 0
    %168 = vmatmul.mubr.bf16.gmra.mrb[0].mxu0 %v124
    %v169 = vpop.f32.mrb[0].mxu0
    %v170 = vadd.f32 %v75, %v169
    %v171 = vpop.f32.mrb[0].mxu0
    %v172 = vadd.f32 %v79, %v171
    %v173 = vpop.f32.mrb[0].mxu0
    %v174 = vadd.f32 %v75, %v173
    %v175 = vpop.f32.mrb[0].mxu0
    %v176 = vadd.f32 %v79, %v175
    %177 = vmatprep.mubr.bf16.mxu0 0
    %178 = vmatmul.mubr.bf16.gmra.mrb[0].mxu0 %v127
    %v179 = vpop.f32.mrb[0].mxu0
    %v180 = vadd.f32 %v75, %v179
    %v181 = vpop.f32.mrb[0].mxu0
    %v182 = vadd.f32 %v79, %v181
    %v183 = vpop.f32.mrb[0].mxu0
    %v184 = vadd.f32 %v75, %v183
    %v185 = vpop.f32.mrb[0].mxu0
    %v186 = vadd.f32 %v79, %v185
    %187 = vmatprep.mubr.bf16.mxu0 0
    %188 = vmatmul.mubr.bf16.gmra.mrb[0].mxu0 %v130
    %v189 = vpop.f32.mrb[0].mxu0
    %v190 = vadd.f32 %v75, %v189
    %v191 = vpop.f32.mrb[0].mxu0
    %v192 = vadd.f32 %v79, %v191
    %v193 = vpop.f32.mrb[0].mxu0
    %v194 = vadd.f32 %v75, %v193
    %v195 = vpop.f32.mrb[0].mxu0
    %v196 = vadd.f32 %v79, %v195
    %197 = vmatprep.mubr.bf16.mxu0 0
    %198 = vmatmul.mubr.bf16.gmra.mrb[0].mxu0 %v133
    %v199 = vpop.f32.mrb[0].mxu0
    %v200 = vadd.f32 %v75, %v199
    %v201 = vpop.f32.mrb[0].mxu0
    %v202 = vadd.f32 %v79, %v201
    %v203 = vpop.f32.mrb[0].mxu0
    %v204 = vadd.f32 %v75, %v203
    %v205 = vpop.f32.mrb[0].mxu0
    %v206 = vadd.f32 %v79, %v205
    %207 = vdwg.mxu0
    %v208 = vpack.c.bf16 %v174, %v170
    %v209 = vpack.c.bf16 %v184, %v180
    %v210 = vpack.c.bf16 %v194, %v190
    %v211 = vpack.c.bf16 %v204, %v200
    %v216 = vunpack.c.l.b16 %v208
    %v217 = vunpack.c.h.b16 %v208
    %v218 = vunpack.c.l.b16 %v209
    %v219 = vunpack.c.h.b16 %v209
    %v220 = vunpack.c.l.b16 %v210
    %v221 = vunpack.c.h.b16 %v210
    %v222 = vunpack.c.l.b16 %v211
    %v223 = vunpack.c.h.b16 %v211
    %v224 = vpack.c.b16 %v216, %v216
    %v225 = vpack.c.b16 %v217, %v217
    %v226 = vpack.c.b16 %v218, %v218
    %v227 = vpack.c.b16 %v219, %v219
    %v228 = vpack.c.b16 %v220, %v220
    %v229 = vpack.c.b16 %v221, %v221
    %v230 = vpack.c.b16 %v222, %v222
    %v231 = vpack.c.b16 %v223, %v223
    %240 = vst [vmem:[#allocation8] sm:$0xf] %v224
    %241 = vst [vmem:[#allocation8 + $0x4] sm:$0xf] %v225
    %242 = vst [vmem:[#allocation8 + $0x8] sm:$0xf] %v226
    %243 = vst [vmem:[#allocation8 + $0xc] sm:$0xf] %v227
    %244 = vst [vmem:[#allocation8 + $0x10] sm:$0xf] %v228
    %245 = vst [vmem:[#allocation8 + $0x14] sm:$0xf] %v229
    %246 = vst [vmem:[#allocation8 + $0x18] sm:$0xf] %v230
    %247 = vst [vmem:[#allocation8 + $0x1c] sm:$0xf] %v231
    %v248 = vpack.c.bf16 %v176, %v172
    %v249 = vpack.c.bf16 %v186, %v182
    %v250 = vpack.c.bf16 %v196, %v192
    %v251 = vpack.c.bf16 %v206, %v202
    %v256 = vunpack.c.l.b16 %v248
    %v257 = vunpack.c.h.b16 %v248
    %v258 = vunpack.c.l.b16 %v249
    %v259 = vunpack.c.h.b16 %v249
    %v260 = vunpack.c.l.b16 %v250
    %v261 = vunpack.c.h.b16 %v250
    %v262 = vunpack.c.l.b16 %v251
    %v263 = vunpack.c.h.b16 %v251
    %v264 = vpack.c.b16 %v256, %v256
    %v265 = vpack.c.b16 %v257, %v257
    %v266 = vpack.c.b16 %v258, %v258
    %v267 = vpack.c.b16 %v259, %v259
    %v268 = vpack.c.b16 %v260, %v260
    %v269 = vpack.c.b16 %v261, %v261
    %v270 = vpack.c.b16 %v262, %v262
    %v271 = vpack.c.b16 %v263, %v263
    %280 = vst [vmem:[#allocation9] sm:$0xf] %v264
    %281 = vst [vmem:[#allocation9 + $0x4] sm:$0xf] %v265
    %282 = vst [vmem:[#allocation9 + $0x8] sm:$0xf] %v266
    %283 = vst [vmem:[#allocation9 + $0xc] sm:$0xf] %v267
    %284 = vst [vmem:[#allocation9 + $0x10] sm:$0xf] %v268
    %285 = vst [vmem:[#allocation9 + $0x14] sm:$0xf] %v269
    %286 = vst [vmem:[#allocation9 + $0x18] sm:$0xf] %v270
    %287 = vst [vmem:[#allocation9 + $0x1c] sm:$0xf] %v271
    // Predicated region
    $region26: #{tpu_custom_call.1} parent=1 // pred_check
      _
    $region27: #{tpu_custom_call.1} parent=1 // pred_check_branch
      %289 = sbr.rel (0) target = $region29
    $region28: #{tpu_custom_call.1} parent=1 // pred_region
      %s291 = ssub.s32 512, 512
      %292 = vsyncadd [#allocation4], %s291
      %s293 = sshll.u32 [#allocation8], 4
      %s294 = int_to_ptr.vmem [resolvable:$true] %s293
      %299 = dma.vmem_to_hbm [thread:$0]  %s294, 512, %s3, [#allocation4], 64, 64, 4
    $region29: #{tpu_custom_call.1} parent=1 // pred_fallthru
      _
    // Predicated region
    $region30: #{tpu_custom_call.1} parent=1 // pred_check
      _
    $region31: #{tpu_custom_call.1} parent=1 // pred_check_branch
      %301 = sbr.rel (0) target = $region33
    $region32: #{tpu_custom_call.1} parent=1 // pred_region
      %s303 = ssub.s32 512, 512
      %304 = vsyncadd [#allocation10], %s303
      %s305 = sshll.u32 [#allocation9], 4
      %s306 = int_to_ptr.vmem [resolvable:$true] %s305
      %311 = dma.vmem_to_hbm [thread:$0]  %s306, 512, %s4, [#allocation10], 64, 64, 4
    $region33: #{tpu_custom_call.1} parent=1 // pred_fallthru
      _
    // Predicated region
    $region34: #{tpu_custom_call.1} parent=1 // pred_check
      _
    $region35: #{tpu_custom_call.1} parent=1 // pred_check_branch
      %313 = sbr.rel (0) target = $region37
    $region36: #{tpu_custom_call.1} parent=1 // pred_region
      %314 = dma.done [#allocation4], 512
    $region37: #{tpu_custom_call.1} parent=1 // pred_fallthru
      _
    // Predicated region
    $region38: #{tpu_custom_call.1} parent=1 // pred_check
      _
    $region39: #{tpu_custom_call.1} parent=1 // pred_check_branch
      %316 = sbr.rel (0) target = $region41
    $region40: #{tpu_custom_call.1} parent=1 // pred_region
      %317 = dma.done [#allocation10], 512
    $region41: #{tpu_custom_call.1} parent=1 // pred_fallthru
      _
    %318 = vsyncpa [#allocation3], 1
    %319 = vsyncpa [#allocation6], 1
    %320 = vsyncpa [#allocation4], 1
    %321 = vsyncpa [#allocation10], 1

</llo_original>
